<compile_context>
chip_gen: v7x
topology: tpu7x:2x2x1
jax: 0.10.0
libtpu: 0.0.40
codegen_flags: <defaults>
</compile_context>

<pallas_src>
import functools

import jax
import jax.numpy as jnp
from jax.experimental import pallas as pl
from jax.experimental.pallas import tpu as pltpu


def _round_up(a, m):
    return ((a + m - 1) // m) * m


def _gaussian_fused_kernel(x_ref, w_ref, b_ref, mu_ref, sigma_ref, *, d_out):
    # Single fused matmul: [TM, Din] @ [Din, 2*Dout] -> [TM, 2*Dout] (f32 acc).
    y = jnp.dot(x_ref[...], w_ref[...], preferred_element_type=jnp.float32)
    y = y + b_ref[...]  # (1, 2*Dout) broadcasts over rows

    # Split the two heads in-kernel and store each directly. The upper-half
    # slice costs an XLU lane shuffle, which is not the binding slot in this
    # HBM-bound kernel; sigmoid (EUP) runs only on the variance half.
    mu_ref[...] = y[:, :d_out].astype(mu_ref.dtype)
    sigma_ref[...] = jax.nn.sigmoid(y[:, d_out:]).astype(sigma_ref.dtype)


def prepare_gaussian_params(w_mu, b_mu, w_var, b_var):
    """One-time parameter prep (hoisted out of the per-forward path):
    fuse the mean/var heads into a single RHS and bias."""
    W2 = 2 * w_mu.shape[1]
    w_fused = jnp.concatenate([w_mu, w_var], axis=1)                  # [Din, 2*Dout]
    b_fused = jnp.concatenate([b_mu, b_var], axis=0).reshape(1, W2)   # [1, 2*Dout]
    return w_fused, b_fused


def gaussian_layer_1d(x_flat, w_fused, b_fused, *, tm=8192, out_dtype=None):
    """x_flat: [N, Din]; w_fused: [Din, 2*Dout]; b_fused: [1, 2*Dout].
    Returns (mu, sigma), each [N, Dout]."""
    N, Din = x_flat.shape
    W2 = w_fused.shape[1]
    Dout = W2 // 2
    if out_dtype is None:
        # Pass out_dtype=jnp.bfloat16 for ~1.5-1.7x on the bandwidth-bound
        # writeback if downstream Normal log-prob/sampling tolerates it.
        out_dtype = x_flat.dtype

    # Row tile: big enough to amortize per-grid-step overhead, small enough
    # that the grid has >= 2 blocks (so both v7x TensorCores get work).
    TM = min(tm, _round_up(pl.cdiv(N, 2), 8))
    grid = (pl.cdiv(N, TM),)   # ragged last block: padded reads, masked writes

    # Right-size the VMEM request from the actual tile math (x's Din and the
    # Dout=64 outputs are lane-padded to 128 in VMEM; everything double-buffered).
    x_bytes = jnp.dtype(x_flat.dtype).itemsize
    o_bytes = jnp.dtype(out_dtype).itemsize
    lane_pad = lambda d: _round_up(d, 128)
    tile_bytes = (2 * TM * lane_pad(Din) * x_bytes            # x double-buffer
                  + 2 * 2 * TM * lane_pad(Dout) * o_bytes     # mu + sigma double-buffer
                  + _round_up(Din, 8) * lane_pad(W2) * 4      # resident fused weights
                  + 8 * lane_pad(W2) * 4)                     # resident fused bias
    vmem_limit = int(min(max(tile_bytes + (4 << 20), 8 << 20), 100 << 20))

    cost = pl.CostEstimate(
        flops=2 * N * Din * W2,
        transcendentals=N * Dout,
        bytes_accessed=(N * Din * x_bytes + Din * W2 * 4 + W2 * 4
                        + 2 * N * Dout * o_bytes),
    )

    mu, sigma = pl.pallas_call(
        functools.partial(_gaussian_fused_kernel, d_out=Dout),
        out_shape=(jax.ShapeDtypeStruct((N, Dout), out_dtype),
                   jax.ShapeDtypeStruct((N, Dout), out_dtype)),
        grid=grid,
        in_specs=[
            pl.BlockSpec((TM, Din), lambda i: (i, 0)),   # streamed row tiles
            pl.BlockSpec((Din, W2), lambda i: (0, 0)),   # resident fused weights
            pl.BlockSpec((1, W2), lambda i: (0, 0)),     # resident fused bias
        ],
        out_specs=(
            pl.BlockSpec((TM, Dout), lambda i: (i, 0)),  # mu
            pl.BlockSpec((TM, Dout), lambda i: (i, 0)),  # sigma
        ),
        compiler_params=pltpu.CompilerParams(
            dimension_semantics=("parallel",),           # megacore / v7x 2-TC
            vmem_limit_bytes=vmem_limit,
        ),
        cost_estimate=cost,
    )(x_flat, w_fused, b_fused)
    return mu, sigma


def gaussian_layer_1d_forward(ins, fused_params, is_seq=True, out_dtype=None):
    """Mirrors GaussianLayer1D.forward (nn_lin=None, dist=Normal).
    Returns the Normal parameters (mu, sigma)."""
    w_fused, b_fused = fused_params
    if is_seq:
        B, S = ins.shape[0], ins.shape[1]
        x_flat = ins.reshape(B * S, ins.shape[-1])
    else:
        B, S = ins.shape[0], None
        x_flat = ins.reshape(B, ins.shape[-1])
    mu, sigma = gaussian_layer_1d(x_flat, w_fused, b_fused, out_dtype=out_dtype)
    if is_seq:
        mu = mu.reshape(B, S, -1)
        sigma = sigma.reshape(B, S, -1)
    # final reshape to poutput['dim'] is a no-op here (dim is 1-D)
    # TODO(synk): MultivariateNormal branch (covariance = sigmoid(std)*I), Flow /
    # RandomWalk dists and the optional nn_lin on the mean head are not implemented.
    return mu, sigma


def _xavier_normal(key, fan_in, fan_out):
    std = jnp.sqrt(2.0 / (fan_in + fan_out))
    # stored as [Din, Dout] (transpose of PyTorch's [Dout, Din]) for the kernel
    return std * jax.random.normal(key, (fan_in, fan_out), dtype=jnp.float32)


if __name__ == "__main__":
    # small shapes consistent with the module: batch=2, seq=8, hidden(Din)=32, out(Dout)=64
    B, S, Din, Dout = 2, 8, 32, 64

    key = jax.random.PRNGKey(0)
    k_x, k_wmu, k_wvar = jax.random.split(key, 3)

    x = jax.random.normal(k_x, (B, S, Din), dtype=jnp.float32)

    w_mu = _xavier_normal(k_wmu, Din, Dout)
    b_mu = jnp.zeros((Dout,), dtype=jnp.float32)
    w_var = _xavier_normal(k_wvar, Din, Dout)
    b_var = jnp.zeros((Dout,), dtype=jnp.float32)

    # Head fusion done once at parameter-prep time (not per forward).
    fused_params = prepare_gaussian_params(w_mu, b_mu, w_var, b_var)

    mu, sigma = gaussian_layer_1d_forward(x, fused_params, is_seq=True)
    jax.block_until_ready((mu, sigma))

    # reference check in plain JAX
    x_flat = x.reshape(B * S, Din)
    mu_ref = (x_flat @ w_mu + b_mu).reshape(B, S, Dout)
    sigma_ref = jax.nn.sigmoid(x_flat @ w_var + b_var).reshape(B, S, Dout)
    assert mu.shape == (B, S, Dout) and sigma.shape == (B, S, Dout)
    assert jnp.allclose(mu, mu_ref, atol=1e-5)
    assert jnp.allclose(sigma, sigma_ref, atol=1e-5)

    print("KERNEL_OK")
</pallas_src>

<mosaic_0001>
module attributes {stable_mosaic.version = 11 : i64} {
  func.func @_gaussian_fused_kernel(%arg0: i32, %arg1: memref<8x32xf32, #tpu.memory_space<vmem>>, %arg2: memref<32x128xf32, #tpu.memory_space<vmem>>, %arg3: memref<1x128xf32, #tpu.memory_space<vmem>>, %arg4: memref<8x64xf32, #tpu.memory_space<vmem>>, %arg5: memref<8x64xf32, #tpu.memory_space<vmem>>) attributes {dimension_semantics = [#tpu.dimension_semantics<parallel>], iteration_bounds = array<i64: 2>, scalar_prefetch = 0 : i64, scratch_operands = 0 : i64, tpu.core_type = #tpu.core_type<tc>, window_params = [{transform_indices = @transform_0, window_bounds = array<i64: 8, 32>}, {pipeline_mode = #tpu.pipeline_mode<synchronous>, transform_indices = @transform_1, window_bounds = array<i64: 32, 128>}, {pipeline_mode = #tpu.pipeline_mode<synchronous>, transform_indices = @transform_2, window_bounds = array<i64: 1, 128>}, {transform_indices = @transform_3, window_bounds = array<i64: 8, 64>}, {transform_indices = @transform_4, window_bounds = array<i64: 8, 64>}]} {
    %c0 = arith.constant 0 : index
    %c0_0 = arith.constant 0 : index
    %0 = vector.load %arg1[%c0, %c0_0] : memref<8x32xf32, #tpu.memory_space<vmem>>, vector<8x32xf32>
    %c0_1 = arith.constant 0 : index
    %c0_2 = arith.constant 0 : index
    %1 = vector.load %arg2[%c0_1, %c0_2] : memref<32x128xf32, #tpu.memory_space<vmem>>, vector<32x128xf32>
    %cst = arith.constant dense<0.000000e+00> : vector<8x128xf32>
    %2 = tpu.matmul %0, %1, %cst {dimension_numbers = #tpu.dot_dimension_numbers<[1], [0], [0], [1], [0, 0, 1, 1], [], []>} : vector<8x32xf32>, vector<32x128xf32>, vector<8x128xf32> -> vector<8x128xf32>
    %c0_3 = arith.constant 0 : index
    %c0_4 = arith.constant 0 : index
    %3 = vector.load %arg3[%c0_3, %c0_4] : memref<1x128xf32, #tpu.memory_space<vmem>>, vector<1x128xf32>
    %4 = vector.broadcast %3 : vector<1x128xf32> to vector<8x128xf32>
    %5 = arith.addf %2, %4 : vector<8x128xf32>
    %6 = vector.extract_strided_slice %5 {offsets = [0, 0], sizes = [8, 64], strides = [1, 1]} : vector<8x128xf32> to vector<8x64xf32>
    %c0_5 = arith.constant 0 : index
    %c0_6 = arith.constant 0 : index
    %7 = vector.load %arg4[%c0_5, %c0_6] : memref<8x64xf32, #tpu.memory_space<vmem>>, vector<8x64xf32>
    tpu.vector_store %arg4[%c0_5, %c0_6], %6 {strides = array<i32>} : memref<8x64xf32, #tpu.memory_space<vmem>>, vector<8x64xf32>,
    %8 = vector.extract_strided_slice %5 {offsets = [0, 64], sizes = [8, 64], strides = [1, 1]} : vector<8x128xf32> to vector<8x64xf32>
    %9 = arith.negf %8 : vector<8x64xf32>
    %10 = math.exp %9 : vector<8x64xf32>
    %cst_7 = arith.constant 1.000000e+00 : f32
    %11 = vector.broadcast %cst_7 : f32 to vector<8x64xf32>
    %12 = arith.addf %11, %10 : vector<8x64xf32>
    %13 = arith.divf %11, %12 : vector<8x64xf32>
    %c0_8 = arith.constant 0 : index
    %c0_9 = arith.constant 0 : index
    %14 = vector.load %arg5[%c0_8, %c0_9] : memref<8x64xf32, #tpu.memory_space<vmem>>, vector<8x64xf32>
    tpu.vector_store %arg5[%c0_8, %c0_9], %13 {strides = array<i32>} : memref<8x64xf32, #tpu.memory_space<vmem>>, vector<8x64xf32>,
    return
  }
  func.func @transform_0(%arg0: i32) -> (i32, i32) {
    %c0_i32 = arith.constant 0 : i32
    %c0_i32_0 = arith.constant 0 : i32
    return %arg0, %c0_i32 : i32, i32
  }
  func.func @transform_1(%arg0: i32) -> (i32, i32) {
    %c0_i32 = arith.constant 0 : i32
    %c0_i32_0 = arith.constant 0 : i32
    %c0_i32_1 = arith.constant 0 : i32
    return %c0_i32, %c0_i32_0 : i32, i32
  }
  func.func @transform_2(%arg0: i32) -> (i32, i32) {
    %c0_i32 = arith.constant 0 : i32
    %c0_i32_0 = arith.constant 0 : i32
    %c0_i32_1 = arith.constant 0 : i32
    return %c0_i32, %c0_i32_0 : i32, i32
  }
  func.func @transform_3(%arg0: i32) -> (i32, i32) {
    %c0_i32 = arith.constant 0 : i32
    %c0_i32_0 = arith.constant 0 : i32
    return %arg0, %c0_i32 : i32, i32
  }
  func.func @transform_4(%arg0: i32) -> (i32, i32) {
    %c0_i32 = arith.constant 0 : i32
    %c0_i32_0 = arith.constant 0 : i32
    return %arg0, %c0_i32 : i32, i32
  }
}

</mosaic_0001>

<llo_original>
// kernel: tpu_custom_call.1
$region0: #{tpu_custom_call.1}
  #allocation0 [shape = 'u32[]', space=smem, size = 0x4, offset = 0x4, fixed_abs, tag = 'smem constant byte address 0x4 - core index']
  #allocation1 [shape = 'u32[144,128]{1,0:T(1,128)}', space=vmem, size = 0x12000, scoped, tag = 'internal scratch']
  %s0 = inlined_call_operand.hbm [shape: f32[16,32], index: 0, kind: input, shape index: {}]
  %s1 = inlined_call_operand.hbm [shape: f32[32,128], index: 1, kind: input, shape index: {}]
  %s2 = inlined_call_operand.vmem [shape: f32[1,128], index: 2, kind: input, shape index: {}]
  %s3 = inlined_call_operand.hbm [shape: f32[16,64], index: 3, kind: output, shape index: {0}]
  %s4 = inlined_call_operand.hbm [shape: f32[16,64], index: 4, kind: output, shape index: {1}]
  %5 = xla_tuple %s3, %s4
  %s6 = sld [smem:[#allocation0]]
  $region61: #{tpu_custom_call.1} parent=0
    _
  %s8 = ssub.s32 1, %s6
  %s9 = scalar_select 0, %s8, %s6
  $region1: #{tpu_custom_call.1} parent=0
    #allocation2 [shape = 'u8[8192]{0}', space=vmem, size = 0x2000, scoped, tag = 'input window, operand 0']
    #allocation3 [shape = 's32[2]{0}', space=sflag, size = 0x8, scoped, tag = 'scoped memory for tpu_custom_call.1']
    #allocation4 [shape = 's32[2]{0}', space=sflag, size = 0x8, scoped, tag = 'scoped memory for tpu_custom_call.1']
    #allocation5 [shape = 'u8[16384]{0}', space=vmem, size = 0x4000, scoped, tag = 'input window, operand 1, single buffered']
    #allocation6 [shape = 's32[1]{0}', space=sflag, size = 0x4, scoped, tag = 'scoped memory for tpu_custom_call.1']
    #allocation7 [shape = 'u8[8192]{0}', space=vmem, size = 0x2000, scoped, tag = 'output window, operand 0']
    #allocation8 [shape = 'u8[8192]{0}', space=vmem, size = 0x2000, scoped, tag = 'output window, operand 1']
    #allocation9 [shape = 's32[2]{0}', space=sflag, size = 0x8, scoped, tag = 'scoped memory for tpu_custom_call.1']
    %10 = vsyncpa [#allocation3], 0
    %s11 = scalar_lea.sflag [#allocation3], 1
    %12 = vsyncpa %s11, 0
    %13 = vsyncpa [#allocation6], 0
    %14 = vsyncpa [#allocation4], 0
    %s15 = scalar_lea.sflag [#allocation4], 1
    %16 = vsyncpa %s15, 0
    %17 = vsyncpa [#allocation9], 0
    %s18 = scalar_lea.sflag [#allocation9], 1
    %19 = vsyncpa %s18, 0
    loop: start=0, step=1, limit=4
    $region2: #{tpu_custom_call.1} parent=1 // loop_pre_header
      _
    $region3: #{tpu_custom_call.1} parent=1 // loop_header
      %s21 = sphi 0, %s25
      %p22 = scmp.ge.s32.totalorder %s21, 4
      %s31 = sphi 0, %s33
      %s34 = sphi 0, %s31
      %s35 = sphi 0, %s34
      %s51 = sphi 0, %s35
      %s55 = sphi 0, %s55
      %s57 = sphi 0, %s55
      %s58 = sphi 0, %s57
      %s72 = sphi 0, %s58
      %s76 = sphi 0, %s76
      %s78 = sphi 0, %s76
      %s79 = sphi 0, %s78
      %s93 = sphi 0, %s79
      %s99 = sphi 0, %s101
      %s102 = sphi 0, %s99
      %s103 = sphi 0, %s102
      %s119 = sphi 0, %s103
      %s125 = sphi 0, %s127
      %s128 = sphi 0, %s125
      %s129 = sphi 0, %s128
      %s145 = sphi 0, %s129
    $region4: #{tpu_custom_call.1} parent=1 // loop_header_branch
      %24 = sbr.rel (%p22) target = $region8
    $region5: #{tpu_custom_call.1} parent=1 // loop_body
      %s26 = ssub.s32 %s21, 1
      %s27 = ssub.s32 %s21, 2
      %s28 = sadd.s32 %s21, 1
      %s29 = ssub.s32 %s21, %s28
      %p30 = scmp.eq.s32.totalorder %s29, 0
      %s32 = sadd.s32 %s31, 1
      %s33 = scalar_select %p30, %s31, %s32
      %p36 = pneg %p30
      %p37 = scmp.eq.s32.totalorder %s21, 1
      %p38 = por %p36, %p37
      %p39 = scmp.ne.s32.totalorder %s31, %s34
      %p40 = scmp.eq.s32.totalorder %s21, 0
      %p41 = por %p39, %p40
      %p42 = scmp.ne.s32.totalorder %s31, %s34
      %p43 = scmp.eq.s32.totalorder %s26, 1
      %p44 = por %p42, %p43
      %p45 = scmp.ne.s32.totalorder %s34, %s35
      %p46 = scmp.eq.s32.totalorder %s26, 0
      %p47 = por %p45, %p46
      %p48 = scmp.ne.s32.totalorder %s34, %s35
      %p49 = scmp.eq.s32.totalorder %s27, 1
      %p50 = por %p48, %p49
      %p52 = scmp.ne.s32.totalorder %s35, %s51
      %p53 = scmp.eq.s32.totalorder %s27, 0
      %p54 = por %p52, %p53
      %s56 = sadd.s32 %s55, 1
      %p59 = scmp.eq.s32.totalorder %s21, 1
      %p60 = scmp.ne.s32.totalorder %s55, %s57
      %p61 = scmp.eq.s32.totalorder %s21, 0
      %p62 = por %p60, %p61
      %p63 = scmp.ne.s32.totalorder %s55, %s57
      %p64 = scmp.eq.s32.totalorder %s26, 1
      %p65 = por %p63, %p64
      %p66 = scmp.ne.s32.totalorder %s57, %s58
      %p67 = scmp.eq.s32.totalorder %s26, 0
      %p68 = por %p66, %p67
      %p69 = scmp.ne.s32.totalorder %s57, %s58
      %p70 = scmp.eq.s32.totalorder %s27, 1
      %p71 = por %p69, %p70
      %p73 = scmp.ne.s32.totalorder %s58, %s72
      %p74 = scmp.eq.s32.totalorder %s27, 0
      %p75 = por %p73, %p74
      %s77 = sadd.s32 %s76, 1
      %p80 = scmp.eq.s32.totalorder %s21, 1
      %p81 = scmp.ne.s32.totalorder %s76, %s78
      %p82 = scmp.eq.s32.totalorder %s21, 0
      %p83 = por %p81, %p82
      %p84 = scmp.ne.s32.totalorder %s76, %s78
      %p85 = scmp.eq.s32.totalorder %s26, 1
      %p86 = por %p84, %p85
      %p87 = scmp.ne.s32.totalorder %s78, %s79
      %p88 = scmp.eq.s32.totalorder %s26, 0
      %p89 = por %p87, %p88
      %p90 = scmp.ne.s32.totalorder %s78, %s79
      %p91 = scmp.eq.s32.totalorder %s27, 1
      %p92 = por %p90, %p91
      %p94 = scmp.ne.s32.totalorder %s79, %s93
      %p95 = scmp.eq.s32.totalorder %s27, 0
      %p96 = por %p94, %p95
      %s97 = ssub.s32 %s21, %s28
      %p98 = scmp.eq.s32.totalorder %s97, 0
      %s100 = sadd.s32 %s99, 1
      %s101 = scalar_select %p98, %s99, %s100
      %p104 = pneg %p98
      %p105 = scmp.eq.s32.totalorder %s21, 1
      %p106 = por %p104, %p105
      %p107 = scmp.ne.s32.totalorder %s99, %s102
      %p108 = scmp.eq.s32.totalorder %s21, 0
      %p109 = por %p107, %p108
      %p110 = scmp.ne.s32.totalorder %s99, %s102
      %p111 = scmp.eq.s32.totalorder %s26, 1
      %p112 = por %p110, %p111
      %p113 = scmp.ne.s32.totalorder %s102, %s103
      %p114 = scmp.eq.s32.totalorder %s26, 0
      %p115 = por %p113, %p114
      %p116 = scmp.ne.s32.totalorder %s102, %s103
      %p117 = scmp.eq.s32.totalorder %s27, 1
      %p118 = por %p116, %p117
      %p120 = scmp.ne.s32.totalorder %s103, %s119
      %p121 = scmp.eq.s32.totalorder %s27, 0
      %p122 = por %p120, %p121
      %s123 = ssub.s32 %s21, %s28
      %p124 = scmp.eq.s32.totalorder %s123, 0
      %s126 = sadd.s32 %s125, 1
      %s127 = scalar_select %p124, %s125, %s126
      %p130 = pneg %p124
      %p131 = scmp.eq.s32.totalorder %s21, 1
      %p132 = por %p130, %p131
      %p133 = scmp.ne.s32.totalorder %s125, %s128
      %p134 = scmp.eq.s32.totalorder %s21, 0
      %p135 = por %p133, %p134
      %p136 = scmp.ne.s32.totalorder %s125, %s128
      %p137 = scmp.eq.s32.totalorder %s26, 1
      %p138 = por %p136, %p137
      %p139 = scmp.ne.s32.totalorder %s128, %s129
      %p140 = scmp.eq.s32.totalorder %s26, 0
      %p141 = por %p139, %p140
      %p142 = scmp.ne.s32.totalorder %s128, %s129
      %p143 = scmp.eq.s32.totalorder %s27, 1
      %p144 = por %p142, %p143
      %p146 = scmp.ne.s32.totalorder %s129, %s145
      %p147 = scmp.eq.s32.totalorder %s27, 0
      %p148 = por %p146, %p147
      %p149 = scmp.le.s32.totalorder 1, %s21
      %p150 = scmp.lt.s32.totalorder %s21, 3
      %p151 = pnand %p149, %p150
      %p152 = pneg %p151
      // Predicated region
      $region9: #{tpu_custom_call.1} parent=5 // pred_check
        _
      $region10: #{tpu_custom_call.1} parent=5 // pred_check_branch
        %154 = sbr.rel (%p151) target = $region12
      $region11: #{tpu_custom_call.1} parent=5 // pred_region
        %s155 = ssub.s32 %s21, 1
        // Predicated region
        $region13: #{tpu_custom_call.1} parent=11 // pred_check
          %p156 = pneg %p68
        $region14: #{tpu_custom_call.1} parent=11 // pred_check_branch
          %158 = sbr.rel (%p156) target = $region16
        $region15: #{tpu_custom_call.1} parent=11 // pred_region
          %s160 = ssub.s32 512, 512
          %161 = vsyncadd [#allocation6], %s160
          %s162 = sshll.u32 [#allocation5], 4
          %s163 = int_to_ptr.vmem [resolvable:$true] %s162
          %168 = dma.hbm_to_vmem [thread:$0]  %s1, 512, %s163, [#allocation6], 128, 128, 8
        $region16: #{tpu_custom_call.1} parent=11 // pred_fallthru
          _
        // Predicated region
        $region17: #{tpu_custom_call.1} parent=11 // pred_check
          %p169 = pneg %p89
        $region18: #{tpu_custom_call.1} parent=11 // pred_check_branch
          %171 = sbr.rel (%p169) target = $region20
        $region19: #{tpu_custom_call.1} parent=11 // pred_region
          _
        $region20: #{tpu_custom_call.1} parent=11 // pred_fallthru
          _
      $region12: #{tpu_custom_call.1} parent=5 // pred_fallthru
        _
      %p172 = scmp.lt.s32.totalorder %s21, 2
      // Predicated region
      $region21: #{tpu_custom_call.1} parent=5 // pred_check
        %p173 = pneg %p172
      $region22: #{tpu_custom_call.1} parent=5 // pred_check_branch
        %175 = sbr.rel (%p173) target = $region24
      $region23: #{tpu_custom_call.1} parent=5 // pred_region
        // Predicated region
        $region25: #{tpu_custom_call.1} parent=23 // pred_check
          %p176 = pneg %p41
        $region26: #{tpu_custom_call.1} parent=23 // pred_check_branch
          %178 = sbr.rel (%p176) target = $region28
        $region27: #{tpu_custom_call.1} parent=23 // pred_region
          %s179 = sand.u32 %s31, 1
          %s180 = scalar_lea.sflag [#allocation3], %s179
          %s181 = sand.u32 %s31, 1
          %s182 = smul.addr %s181, 8
          %s183 = scalar_lea.vmem [#allocation2], %s182
          %s185 = ssub.s32 128, 128
          %186 = vsyncadd %s180, %s185
          %s187 = smul.addr %s21, 128
          %s188 = scalar_lea.hbm %s0, %s187
          %s190 = sshll.u32 %s183, 4
          %s191 = int_to_ptr.vmem [resolvable:$true] %s190
          %193 = dma.hbm_to_vmem [thread:$0]  %s188, 128, %s191, %s180
        $region28: #{tpu_custom_call.1} parent=23 // pred_fallthru
          _
      $region24: #{tpu_custom_call.1} parent=5 // pred_fallthru
        _
      %p194 = scmp.le.s32.totalorder 1, %s21
      %p195 = scmp.lt.s32.totalorder %s21, 3
      %p196 = pnand %p194, %p195
      %p197 = pneg %p196
      // Predicated region
      $region29: #{tpu_custom_call.1} parent=5 // pred_check
        _
      $region30: #{tpu_custom_call.1} parent=5 // pred_check_branch
        %199 = sbr.rel (%p196) target = $region32
      $region31: #{tpu_custom_call.1} parent=5 // pred_region
        %s200 = ssub.s32 %s21, 1
        %s201 = sand.u32 %s34, 1
        %s202 = scalar_lea.sflag [#allocation3], %s201
        %s203 = sand.u32 %s34, 1
        %s204 = smul.addr %s203, 8
        %s205 = scalar_lea.vmem [#allocation2], %s204
        // Predicated region
        $region33: #{tpu_custom_call.1} parent=31 // pred_check
          %p206 = pneg %p47
        $region34: #{tpu_custom_call.1} parent=31 // pred_check_branch
          %208 = sbr.rel (%p206) target = $region36
        $region35: #{tpu_custom_call.1} parent=31 // pred_region
          %209 = dma.done %s202, 128
        $region36: #{tpu_custom_call.1} parent=31 // pred_fallthru
          _
        // Predicated region
        $region37: #{tpu_custom_call.1} parent=31 // pred_check
          %p210 = pneg %p68
        $region38: #{tpu_custom_call.1} parent=31 // pred_check_branch
          %212 = sbr.rel (%p210) target = $region40
        $region39: #{tpu_custom_call.1} parent=31 // pred_region
          %213 = dma.done [#allocation6], 512
        $region40: #{tpu_custom_call.1} parent=31 // pred_fallthru
          _
        %s214 = sand.u32 %s34, 1
        %s215 = scalar_lea.sflag [#allocation3], %s214
        %s216 = sand.u32 %s34, 1
        %s217 = smul.addr %s216, 8
        %s218 = scalar_lea.vmem [#allocation2], %s217
        %p219 = pneg %p47
        %p220 = pneg %p44
        %p221 = pneg %p68
        %p222 = pneg %p65
        %p223 = pneg %p89
        %p224 = pneg %p86
        %p225 = pneg %p115
        %p226 = pneg %p112
        %s227 = sand.u32 %s102, 1
        %s228 = scalar_lea.sflag [#allocation4], %s227
        %s229 = sand.u32 %s102, 1
        %s230 = smul.addr %s229, 8
        %s231 = scalar_lea.vmem [#allocation7], %s230
        %p232 = pneg %p141
        %p233 = pneg %p138
        %s234 = sand.u32 %s128, 1
        %s235 = scalar_lea.sflag [#allocation9], %s234
        %s236 = sand.u32 %s128, 1
        %s237 = smul.addr %s236, 8
        %s238 = scalar_lea.vmem [#allocation8], %s237
        %v239 = vld [vmem:[%s205] sm:$0xff]
        %v240 = vld [vmem:[#allocation5] sm:$0xff]
        %v241 = vld [vmem:[#allocation5 + $0x8] sm:$0xff]
        %v242 = vld [vmem:[#allocation5 + $0x10] sm:$0xff]
        %v243 = vld [vmem:[#allocation5 + $0x18] sm:$0xff]
        %v244 = vld [vmem:[%s2] sm:$0x1]
        %v246 = vlaneseq
        %v247 = vshrl.u32 %v246, 7
        %v248 = vsub.s32 0, %v247
        %v249 = vrot.slane %v244, %v248
        %vm251 = vcmask 261120
        %v253 = vsel %vm251, %v239, 0
        %255 = vmatprep.subr.mxu0 0.0
        %256 = vmatpush1.msra.mxu0 %v240
        %257 = vmatprep.subr.mxu0 0.0
        %258 = vmatpush1.msra.mxu0 %v241
        %259 = vmatprep.subr.mxu0 0.0
        %260 = vmatpush1.msra.mxu0 %v242
        %261 = vmatprep.subr.mxu0 0.0
        %262 = vmatpush1.msra.mxu0 %v243
        %263 = vmatprep.subr.mxu0 0.0
        %264 = vmatpush1.msra.mxu0 0.0
        %265 = vmatprep.subr.mxu0 0.0
        %266 = vmatpush1.msra.mxu0 0.0
        %267 = vmatprep.subr.mxu0 0.0
        %268 = vmatpush1.msra.mxu0 0.0
        %269 = vmatprep.subr.mxu0 0.0
        %270 = vmatpush1.msra.mxu0 0.0
        %271 = vmatprep.subr.mxu0 0.0
        %272 = vmatpush1.msra.mxu0 0.0
        %273 = vmatprep.subr.mxu0 0.0
        %274 = vmatpush1.msra.mxu0 0.0
        %275 = vmatprep.subr.mxu0 0.0
        %276 = vmatpush1.msra.mxu0 0.0
        %277 = vmatprep.subr.mxu0 0.0
        %278 = vmatpush1.msra.mxu0 0.0
        %279 = vmatprep.subr.mxu0 0.0
        %280 = vmatpush1.msra.mxu0 0.0
        %281 = vmatprep.subr.mxu0 0.0
        %282 = vmatpush1.msra.mxu0 0.0
        %283 = vmatprep.subr.mxu0 0.0
        %284 = vmatpush1.msra.mxu0 0.0
        %285 = vmatprep.subr.mxu0 0.0
        %286 = vmatpush1.msra.mxu0 0.0
        %287 = vmatprep.subr.mxu0 0.0
        %288 = vmatpush1.msra.mxu0 0.0
        %289 = vmatprep.subr.mxu0 0.0
        %290 = vmatpush1.msra.mxu0 0.0
        %291 = vmatprep.subr.mxu0 0.0
        %292 = vmatpush1.msra.mxu0 0.0
        %293 = vmatprep.subr.mxu0 0.0
        %294 = vmatpush1.msra.mxu0 0.0
        %295 = vmatprep.subr.mxu0 0.0
        %296 = vmatpush1.msra.mxu0 0.0
        %297 = vmatprep.subr.mxu0 0.0
        %298 = vmatpush1.msra.mxu0 0.0
        %299 = vmatprep.subr.mxu0 0.0
        %300 = vmatpush1.msra.mxu0 0.0
        %301 = vmatprep.subr.mxu0 0.0
        %302 = vmatpush1.msra.mxu0 0.0
        %303 = vmatprep.subr.mxu0 0.0
        %304 = vmatpush1.msra.mxu0 0.0
        %305 = vmatprep.subr.mxu0 0.0
        %306 = vmatpush1.msra.mxu0 0.0
        %307 = vmatprep.subr.mxu0 0.0
        %308 = vmatpush1.msra.mxu0 0.0
        %309 = vmatprep.subr.mxu0 0.0
        %310 = vmatpush1.msra.mxu0 0.0
        %311 = vmatprep.subr.mxu0 0.0
        %312 = vmatpush1.msra.mxu0 0.0
        %313 = vmatprep.subr.mxu0 0.0
        %314 = vmatpush1.msra.mxu0 0.0
        %315 = vmatprep.subr.mxu0 0.0
        %316 = vmatpush1.msra.mxu0 0.0
        %317 = vmatprep.subr.mxu0 0.0
        %318 = vmatpush1.msra.mxu0 0.0
        %319 = vmatprep.mubr.f32.mxu0 0.0
        %320 = vmatmul.mubr.f32.gmra.mrb[0].mxu0 %v253
        %v321 = vpop.f32.mrb[0].mxu0
        %v322 = vadd.f32 %v249, %v321
        %v323 = vpop.f32.mrb[0].mxu0
        %324 = vdwg.mxu0
        %vm325 = vcmask 523264
        %326 = vst.msk [vmem:[%s231] sm:$0xff] %vm325, %v322
        %v327 = vxor.u32 %v322, 2147483648
        %v328 = vmul.f32 %v327, 1.442695
        %v329 = vpow.pop %v328
        %v330 = vadd.f32 %v329, 1.0
        %v331 = vrcp.pop %v330
        %v332 = vmul.f32 1.0, %v331
        %334 = vrot.lane.b32.xlu0 %v332, 64
        %v335 = vpop.permute.xlu0 %334
        %337 = vst.msk [vmem:[%s238] sm:$0xff] %vm325, %v335
        %s338 = sand.u32 %s102, 1
        %s339 = scalar_lea.sflag [#allocation4], %s338
        %s340 = sand.u32 %s102, 1
        %s341 = smul.addr %s340, 8
        %s342 = scalar_lea.vmem [#allocation7], %s341
        %s343 = sand.u32 %s128, 1
        %s344 = scalar_lea.sflag [#allocation9], %s343
        %s345 = sand.u32 %s128, 1
        %s346 = smul.addr %s345, 8
        %s347 = scalar_lea.vmem [#allocation8], %s346
        // Predicated region
        $region41: #{tpu_custom_call.1} parent=31 // pred_check
          %p348 = pneg %p112
        $region42: #{tpu_custom_call.1} parent=31 // pred_check_branch
          %350 = sbr.rel (%p348) target = $region44
        $region43: #{tpu_custom_call.1} parent=31 // pred_region
          %s352 = ssub.s32 128, 128
          %353 = vsyncadd %s339, %s352
          %s354 = smul.addr %s26, 128
          %s355 = scalar_lea.hbm %s3, %s354
          %s357 = sshll.u32 %s342, 4
          %s358 = int_to_ptr.vmem [resolvable:$true] %s357
          %360 = dma.vmem_to_hbm [thread:$0]  %s358, 128, %s355, %s339
        $region44: #{tpu_custom_call.1} parent=31 // pred_fallthru
          _
        // Predicated region
        $region45: #{tpu_custom_call.1} parent=31 // pred_check
          %p361 = pneg %p138
        $region46: #{tpu_custom_call.1} parent=31 // pred_check_branch
          %363 = sbr.rel (%p361) target = $region48
        $region47: #{tpu_custom_call.1} parent=31 // pred_region
          %s365 = ssub.s32 128, 128
          %366 = vsyncadd %s344, %s365
          %s367 = smul.addr %s26, 128
          %s368 = scalar_lea.hbm %s4, %s367
          %s370 = sshll.u32 %s347, 4
          %s371 = int_to_ptr.vmem [resolvable:$true] %s370
          %373 = dma.vmem_to_hbm [thread:$0]  %s371, 128, %s368, %s344
        $region48: #{tpu_custom_call.1} parent=31 // pred_fallthru
          _
      $region32: #{tpu_custom_call.1} parent=5 // pred_fallthru
        _
      %p374 = scmp.le.s32.totalorder 2, %s21
      // Predicated region
      $region49: #{tpu_custom_call.1} parent=5 // pred_check
        %p375 = pneg %p374
      $region50: #{tpu_custom_call.1} parent=5 // pred_check_branch
        %377 = sbr.rel (%p375) target = $region52
      $region51: #{tpu_custom_call.1} parent=5 // pred_region
        %s378 = ssub.s32 %s21, 2
        // Predicated region
        $region53: #{tpu_custom_call.1} parent=51 // pred_check
          %p379 = pneg %p118
        $region54: #{tpu_custom_call.1} parent=51 // pred_check_branch
          %381 = sbr.rel (%p379) target = $region56
        $region55: #{tpu_custom_call.1} parent=51 // pred_region
          %s382 = sand.u32 %s103, 1
          %s383 = scalar_lea.sflag [#allocation4], %s382
          %s384 = sand.u32 %s103, 1
          %s385 = smul.addr %s384, 8
          %s386 = scalar_lea.vmem [#allocation7], %s385
          %387 = dma.done %s383, 128
        $region56: #{tpu_custom_call.1} parent=51 // pred_fallthru
          _
        // Predicated region
        $region57: #{tpu_custom_call.1} parent=51 // pred_check
          %p388 = pneg %p144
        $region58: #{tpu_custom_call.1} parent=51 // pred_check_branch
          %390 = sbr.rel (%p388) target = $region60
        $region59: #{tpu_custom_call.1} parent=51 // pred_region
          %s391 = sand.u32 %s129, 1
          %s392 = scalar_lea.sflag [#allocation9], %s391
          %s393 = sand.u32 %s129, 1
          %s394 = smul.addr %s393, 8
          %s395 = scalar_lea.vmem [#allocation8], %s394
          %396 = dma.done %s392, 128
        $region60: #{tpu_custom_call.1} parent=51 // pred_fallthru
          _
      $region52: #{tpu_custom_call.1} parent=5 // pred_fallthru
        _
    $region6: #{tpu_custom_call.1} parent=1 // loop_footer
      %s25 = sadd.s32 1, %s21
    $region7: #{tpu_custom_call.1} parent=1 // loop_footer_branch
      %20 = sbr.rel target = $region3
    $region8: #{tpu_custom_call.1} parent=1 // loop_exit
      _
    %397 = vsyncpa [#allocation3], 1
    %s398 = scalar_lea.sflag [#allocation3], 1
    %399 = vsyncpa %s398, 1
    %400 = vsyncpa [#allocation6], 1
    %401 = vsyncpa [#allocation4], 1
    %s402 = scalar_lea.sflag [#allocation4], 1
    %403 = vsyncpa %s402, 1
    %404 = vsyncpa [#allocation9], 1
    %s405 = scalar_lea.sflag [#allocation9], 1
    %406 = vsyncpa %s405, 1

</llo_original>
